<compile_context>
chip_gen: v5e
topology: v5e:2x2
jax: 0.10.0
libtpu: 0.0.40
codegen_flags: <defaults>
</compile_context>

<pallas_src>
import jax
import jax.numpy as jnp
from jax.experimental import pallas as pl
from jax.experimental.pallas import tpu as pltpu

_DEFAULT_TILE_B = 512  # rows per grid step (multiple of 8, hits HBM roofline)


def _multi_input_kernel(x_ref, y_ref, w_ref, o_ref):
    # add (VPU) -> matmul (MXU, f32 accumulate) -> relu (VPU); single VMEM tile.
    z = x_ref[...] + y_ref[...]
    zw = jnp.dot(z, w_ref[...], preferred_element_type=jnp.float32)
    o_ref[...] = jnp.maximum(zw, 0.0)


def multi_input_forward(x: jax.Array, y: jax.Array, w: jax.Array,
                        *, tile_b: int = _DEFAULT_TILE_B) -> jax.Array:
    """relu((x + y) @ w) as one Pallas TPU kernel, batch-tiled over a 1-D grid."""
    assert x.shape == y.shape, "x and y must have identical shapes"
    B, D = x.shape
    assert w.shape == (D, D)

    # Row tile: full batch when it fits in one tile (a full-extent block is
    # legal for any B); otherwise a multiple-of-8 tile. A partial last tile is
    # handled by Pallas (padded reads, masked writes) and rows are independent,
    # so padded rows never contaminate valid output rows.
    if B <= tile_b:
        tb = B
    else:
        tb = max(8, (tile_b // 8) * 8)
    grid = (pl.cdiv(B, tb),)

    cost = pl.CostEstimate(
        flops=2 * B * D * D + 2 * B * D,          # matmul + add + relu
        transcendentals=0,
        bytes_accessed=(3 * B * D + D * D) * 4,   # x, y, out, w (f32)
    )

    return pl.pallas_call(
        _multi_input_kernel,
        out_shape=jax.ShapeDtypeStruct((B, D), jnp.float32),
        grid=grid,
        in_specs=[
            pl.BlockSpec((tb, D), lambda i: (i, 0)),   # x: tiled over batch
            pl.BlockSpec((tb, D), lambda i: (i, 0)),   # y: tiled over batch
            pl.BlockSpec((D, D), lambda i: (0, 0)),    # w: VMEM-resident, DMA'd once
        ],
        out_specs=pl.BlockSpec((tb, D), lambda i: (i, 0)),
        compiler_params=pltpu.CompilerParams(
            dimension_semantics=("parallel",),          # shard batch across v7x's 2 TCs
        ),
        cost_estimate=cost,
    )(x, y, w)


if __name__ == "__main__":
    key = jax.random.PRNGKey(0)
    k_x, k_y, k_w = jax.random.split(key, 3)

    B, D = 8, 100  # module's weight is (100, 100); batch kept small
    x = jax.random.normal(k_x, (B, D), dtype=jnp.float32)
    y = jax.random.normal(k_y, (B, D), dtype=jnp.float32)
    # Deterministic parameter init (mirrors torch.randn((100, 100))).
    w = jax.random.normal(k_w, (D, D), dtype=jnp.float32)

    out = multi_input_forward(x, y, w)
    out = jax.block_until_ready(out)

    # Sanity check vs. plain JAX reference.
    ref = jnp.maximum((x + y) @ w, 0.0)
    assert out.shape == (B, D)
    assert jnp.allclose(out, ref, atol=1e-3, rtol=1e-3), "mismatch vs reference"

    print("KERNEL_OK")
</pallas_src>

<mosaic_0001>
module attributes {stable_mosaic.version = 11 : i64} {
  func.func @_multi_input_kernel(%arg0: i32, %arg1: memref<8x100xf32, #tpu.memory_space<vmem>>, %arg2: memref<8x100xf32, #tpu.memory_space<vmem>>, %arg3: memref<100x100xf32, #tpu.memory_space<vmem>>, %arg4: memref<8x100xf32, #tpu.memory_space<vmem>>) attributes {dimension_semantics = [#tpu.dimension_semantics<parallel>], iteration_bounds = array<i64: 1>, scalar_prefetch = 0 : i64, scratch_operands = 0 : i64, tpu.core_type = #tpu.core_type<tc>, window_params = [{transform_indices = @transform_0, window_bounds = array<i64: 8, 100>}, {transform_indices = @transform_1, window_bounds = array<i64: 8, 100>}, {pipeline_mode = #tpu.pipeline_mode<synchronous>, transform_indices = @transform_2, window_bounds = array<i64: 100, 100>}, {transform_indices = @transform_3, window_bounds = array<i64: 8, 100>}]} {
    %c0 = arith.constant 0 : index
    %c0_0 = arith.constant 0 : index
    %0 = vector.load %arg1[%c0, %c0_0] : memref<8x100xf32, #tpu.memory_space<vmem>>, vector<8x100xf32>
    %c0_1 = arith.constant 0 : index
    %c0_2 = arith.constant 0 : index
    %1 = vector.load %arg2[%c0_1, %c0_2] : memref<8x100xf32, #tpu.memory_space<vmem>>, vector<8x100xf32>
    %2 = arith.addf %0, %1 : vector<8x100xf32>
    %c0_3 = arith.constant 0 : index
    %c0_4 = arith.constant 0 : index
    %3 = vector.load %arg3[%c0_3, %c0_4] : memref<100x100xf32, #tpu.memory_space<vmem>>, vector<100x100xf32>
    %cst = arith.constant dense<0.000000e+00> : vector<8x100xf32>
    %4 = tpu.matmul %2, %3, %cst {dimension_numbers = #tpu.dot_dimension_numbers<[1], [0], [0], [1], [0, 0, 1, 1], [], []>} : vector<8x100xf32>, vector<100x100xf32>, vector<8x100xf32> -> vector<8x100xf32>
    %cst_5 = arith.constant 0.000000e+00 : f32
    %5 = vector.broadcast %cst_5 : f32 to vector<8x100xf32>
    %6 = arith.maximumf %4, %5 : vector<8x100xf32>
    %c0_6 = arith.constant 0 : index
    %c0_7 = arith.constant 0 : index
    %7 = vector.load %arg4[%c0_6, %c0_7] : memref<8x100xf32, #tpu.memory_space<vmem>>, vector<8x100xf32>
    tpu.vector_store %arg4[%c0_6, %c0_7], %6 {strides = array<i32>} : memref<8x100xf32, #tpu.memory_space<vmem>>, vector<8x100xf32>,
    return
  }
  func.func @transform_0(%arg0: i32) -> (i32, i32) {
    %c0_i32 = arith.constant 0 : i32
    %c0_i32_0 = arith.constant 0 : i32
    return %arg0, %c0_i32 : i32, i32
  }
  func.func @transform_1(%arg0: i32) -> (i32, i32) {
    %c0_i32 = arith.constant 0 : i32
    %c0_i32_0 = arith.constant 0 : i32
    return %arg0, %c0_i32 : i32, i32
  }
  func.func @transform_2(%arg0: i32) -> (i32, i32) {
    %c0_i32 = arith.constant 0 : i32
    %c0_i32_0 = arith.constant 0 : i32
    %c0_i32_1 = arith.constant 0 : i32
    return %c0_i32, %c0_i32_0 : i32, i32
  }
  func.func @transform_3(%arg0: i32) -> (i32, i32) {
    %c0_i32 = arith.constant 0 : i32
    %c0_i32_0 = arith.constant 0 : i32
    return %arg0, %c0_i32 : i32, i32
  }
}

</mosaic_0001>

<llo_original>
// kernel: tpu_custom_call.1
$region0: #{tpu_custom_call.1}
  #allocation0 [shape = 'u32[]', space=smem, size = 0x4, offset = 0x4, fixed_abs, tag = 'smem constant byte address 0x4 - core index']
  #allocation1 [shape = 'u32[72,128]{1,0:T(1,128)}', space=vmem, size = 0x9000, scoped, tag = 'internal scratch']
  %s0 = inlined_call_operand.hbm [shape: f32[8,100], index: 0, kind: input, shape index: {}]
  %s1 = inlined_call_operand.hbm [shape: f32[8,100], index: 1, kind: input, shape index: {}]
  %s2 = inlined_call_operand.hbm [shape: f32[100,100], index: 2, kind: input, shape index: {}]
  %s3 = inlined_call_operand.hbm [shape: f32[8,100], index: 3, kind: output, shape index: {}]
  %s4 = sld [smem:[#allocation0]]
  $region34: #{tpu_custom_call.1} parent=0
    _
  %s6 = ssub.s32 1, %s4
  %s7 = scalar_select 0, %s6, %s4
  $region1: #{tpu_custom_call.1} parent=0
    #allocation2 [shape = 'u8[4096]{0}', space=vmem, size = 0x1000, scoped, tag = 'input window, operand 0, single buffered']
    #allocation3 [shape = 's32[1]{0}', space=sflag, size = 0x4, scoped, tag = 'scoped memory for tpu_custom_call.1']
    #allocation4 [shape = 's32[1]{0}', space=sflag, size = 0x4, scoped, tag = 'scoped memory for tpu_custom_call.1']
    #allocation5 [shape = 'u8[4096]{0}', space=vmem, size = 0x1000, scoped, tag = 'input window, operand 1, single buffered']
    #allocation6 [shape = 's32[1]{0}', space=sflag, size = 0x4, scoped, tag = 'scoped memory for tpu_custom_call.1']
    #allocation7 [shape = 'u8[53248]{0}', space=vmem, size = 0xd000, scoped, tag = 'input window, operand 2, single buffered']
    #allocation8 [shape = 'u8[4096]{0}', space=vmem, size = 0x1000, scoped, tag = 'output window, operand 0, single buffered']
    %8 = vsyncpa [#allocation3], 0
    %9 = vsyncpa [#allocation6], 0
    %10 = vsyncpa [#allocation4], 0
    // Predicated region
    $region2: #{tpu_custom_call.1} parent=1 // pred_check
      _
    $region3: #{tpu_custom_call.1} parent=1 // pred_check_branch
      %12 = sbr.rel (0) target = $region5
    $region4: #{tpu_custom_call.1} parent=1 // pred_region
      %14 = vsyncadd [#allocation3], 0
      %s16 = sshll.u32 %s0, 4
      %s17 = int_to_ptr.hbm [resolvable:$true] %s16
      %s18 = sshll.u32 [#allocation2], 4
      %s19 = int_to_ptr.vmem [resolvable:$true] %s18
      %21 = dma.hbm_to_vmem [thread:$0]  %s17, 128, %s19, [#allocation3]
    $region5: #{tpu_custom_call.1} parent=1 // pred_fallthru
      _
    // Predicated region
    $region6: #{tpu_custom_call.1} parent=1 // pred_check
      _
    $region7: #{tpu_custom_call.1} parent=1 // pred_check_branch
      %23 = sbr.rel (0) target = $region9
    $region8: #{tpu_custom_call.1} parent=1 // pred_region
      %25 = vsyncadd [#allocation6], 0
      %s27 = sshll.u32 %s1, 4
      %s28 = int_to_ptr.hbm [resolvable:$true] %s27
      %s29 = sshll.u32 [#allocation5], 4
      %s30 = int_to_ptr.vmem [resolvable:$true] %s29
      %32 = dma.hbm_to_vmem [thread:$0]  %s28, 128, %s30, [#allocation6]
    $region9: #{tpu_custom_call.1} parent=1 // pred_fallthru
      _
    // Predicated region
    $region10: #{tpu_custom_call.1} parent=1 // pred_check
      _
    $region11: #{tpu_custom_call.1} parent=1 // pred_check_branch
      %34 = sbr.rel (0) target = $region13
    $region12: #{tpu_custom_call.1} parent=1 // pred_region
      %36 = vsyncadd [#allocation6], 0
      %s37 = sshll.u32 %s2, 4
      %s38 = int_to_ptr.hbm [resolvable:$true] %s37
      %s39 = sshll.u32 [#allocation7], 4
      %s40 = int_to_ptr.vmem [resolvable:$true] %s39
      %45 = dma.hbm_to_vmem [thread:$0]  %s38, 1664, %s40, [#allocation6], 128, 128, 8
    $region13: #{tpu_custom_call.1} parent=1 // pred_fallthru
      _
    // Predicated region
    $region14: #{tpu_custom_call.1} parent=1 // pred_check
      _
    $region15: #{tpu_custom_call.1} parent=1 // pred_check_branch
      %47 = sbr.rel (0) target = $region17
    $region16: #{tpu_custom_call.1} parent=1 // pred_region
      %49 = dma.done [#allocation3], 128
    $region17: #{tpu_custom_call.1} parent=1 // pred_fallthru
      _
    // Predicated region
    $region18: #{tpu_custom_call.1} parent=1 // pred_check
      _
    $region19: #{tpu_custom_call.1} parent=1 // pred_check_branch
      %51 = sbr.rel (0) target = $region21
    $region20: #{tpu_custom_call.1} parent=1 // pred_region
      %53 = dma.done [#allocation6], 128
    $region21: #{tpu_custom_call.1} parent=1 // pred_fallthru
      _
    // Predicated region
    $region22: #{tpu_custom_call.1} parent=1 // pred_check
      _
    $region23: #{tpu_custom_call.1} parent=1 // pred_check_branch
      %55 = sbr.rel (0) target = $region25
    $region24: #{tpu_custom_call.1} parent=1 // pred_region
      %57 = dma.done [#allocation6], 1664
    $region25: #{tpu_custom_call.1} parent=1 // pred_fallthru
      _
    %v58 = vld [vmem:[#allocation2] sm:$0xff]
    %v59 = vld [vmem:[#allocation5] sm:$0xff]
    %v60 = vadd.f32 %v58, %v59
    %v61 = vld [vmem:[#allocation7] sm:$0xff]
    %v62 = vld [vmem:[#allocation7 + $0x8] sm:$0xff]
    %v63 = vld [vmem:[#allocation7 + $0x10] sm:$0xff]
    %v64 = vld [vmem:[#allocation7 + $0x18] sm:$0xff]
    %v65 = vld [vmem:[#allocation7 + $0x20] sm:$0xff]
    %v66 = vld [vmem:[#allocation7 + $0x28] sm:$0xff]
    %v67 = vld [vmem:[#allocation7 + $0x30] sm:$0xff]
    %v68 = vld [vmem:[#allocation7 + $0x38] sm:$0xff]
    %v69 = vld [vmem:[#allocation7 + $0x40] sm:$0xff]
    %v70 = vld [vmem:[#allocation7 + $0x48] sm:$0xff]
    %v71 = vld [vmem:[#allocation7 + $0x50] sm:$0xff]
    %v72 = vld [vmem:[#allocation7 + $0x58] sm:$0xff]
    %v73 = vld [vmem:[#allocation7 + $0x60] sm:$0xf]
    %vm74 = vcmask 818176
    %v76 = vsel %vm74, %v60, 0
    %vm78 = vcmask 1043456
    %v80 = vsel %vm78, %v73, 0
    %82 = vmatpush.msra.mxu0 0.0
    %83 = vmatpush.msra.mxu0 0.0
    %84 = vmatpush.msra.mxu0 0.0
    %85 = vmatpush.msra.mxu0 %v80
    %86 = vmatpush.msra.mxu0 %v72
    %87 = vmatpush.msra.mxu0 %v71
    %88 = vmatpush.msra.mxu0 %v70
    %89 = vmatpush.msra.mxu0 %v69
    %90 = vmatpush.msra.mxu0 %v68
    %91 = vmatpush.msra.mxu0 %v67
    %92 = vmatpush.msra.mxu0 %v66
    %93 = vmatpush.msra.mxu0 %v65
    %94 = vmatpush.msra.mxu0 %v64
    %95 = vmatpush.msra.mxu0 %v63
    %96 = vmatpush.msra.mxu0 %v62
    %97 = vmatpush.msra.mxu0 %v61
    %98 = vmatmul.f32.gmra.mxu0 %v76
    %v99 = vpop.f32.mrf.mxu0
    %v100 = vadd.f32 0.0, %v99
    %101 = vdwg.mxu0
    %v102 = vmax.f32 %v100, 0.0
    %103 = vst.msk [vmem:[#allocation8] sm:$0xff] %vm74, %v102
    // Predicated region
    $region26: #{tpu_custom_call.1} parent=1 // pred_check
      _
    $region27: #{tpu_custom_call.1} parent=1 // pred_check_branch
      %105 = sbr.rel (0) target = $region29
    $region28: #{tpu_custom_call.1} parent=1 // pred_region
      %107 = vsyncadd [#allocation4], 0
      %s109 = sshll.u32 [#allocation8], 4
      %s110 = int_to_ptr.vmem [resolvable:$true] %s109
      %s111 = sshll.u32 %s3, 4
      %s112 = int_to_ptr.hbm [resolvable:$true] %s111
      %114 = dma.vmem_to_hbm [thread:$0]  %s110, 128, %s112, [#allocation4]
    $region29: #{tpu_custom_call.1} parent=1 // pred_fallthru
      _
    // Predicated region
    $region30: #{tpu_custom_call.1} parent=1 // pred_check
      _
    $region31: #{tpu_custom_call.1} parent=1 // pred_check_branch
      %116 = sbr.rel (0) target = $region33
    $region32: #{tpu_custom_call.1} parent=1 // pred_region
      %118 = dma.done [#allocation4], 128
    $region33: #{tpu_custom_call.1} parent=1 // pred_fallthru
      _
    %119 = vsyncpa [#allocation3], 1
    %120 = vsyncpa [#allocation6], 1
    %121 = vsyncpa [#allocation4], 1

</llo_original>
